<compile_context>
chip_gen: v6e
topology: v6e:2x2x1
jax: 0.10.0
libtpu: 0.0.40
codegen_flags: <defaults>
</compile_context>

<pallas_src>
import math

import jax
import jax.numpy as jnp
from jax.experimental import pallas as pl
from jax.experimental.pallas import tpu as pltpu


def _round_up(x, m):
    return (x + m - 1) // m * m


# ----------------------------------------------------------------------------
# Pass 1: h = x @ W - bias   (batch-fused feature transform)
# ----------------------------------------------------------------------------
def _h_kernel(x_ref, w_ref, b_ref, h_ref):
    # x_ref: (TH, F_in)  w_ref: (F_in, F_pad)  b_ref: (1, F_pad)  h_ref: (TH, F_pad)
    h = jnp.dot(x_ref[...], w_ref[...], preferred_element_type=jnp.float32)
    h_ref[...] = (h - b_ref[...]).astype(h_ref.dtype)


# ----------------------------------------------------------------------------
# Pass 2: out = relu(adj @ h)   (tiled aggregation with f32 accumulator)
# ----------------------------------------------------------------------------
def _agg_kernel(adj_ref, h_ref, o_ref, acc_ref):
    # adj_ref: (TM, TK)  h_ref: (TK, F_pad)  o_ref: (TM, F_pad)  acc_ref: (TM, F_pad) f32
    k = pl.program_id(2)

    @pl.when(k == 0)
    def _():
        acc_ref[...] = jnp.zeros_like(acc_ref)

    acc_ref[...] += jnp.dot(adj_ref[...], h_ref[...],
                            preferred_element_type=jnp.float32)

    @pl.when(k == pl.num_programs(2) - 1)
    def _():
        o_ref[...] = jnp.maximum(acc_ref[...], 0.0).astype(o_ref.dtype)


def graph_convolution(x, adj, weight, bias, *, compute_dtype=jnp.float32,
                      adj_tile=256):
    """GCN forward: relu(adj @ (x @ weight - bias)).

    x: (B, N, F_in) f32; adj: (B, N, N) f32; weight: (F_in, F_out); bias: (1,1,F_out).
    compute_dtype: dtype fed to the MXU (pass jnp.bfloat16 on v6e/v7x for speed);
                   accumulation stays f32 via preferred_element_type.
    adj_tile: tile edge for adj when N > adj_tile. 256 keeps the double-buffered
              f32 adj tile at 0.5 MiB, safe for v7x's 64 MiB VMEM and matched to
              its 2x256^2 MXU (and a multiple of 128 for the v5e 4x128^2 MXU).
    """
    B, N, F_in = x.shape
    F_out = weight.shape[1]
    LANE = 128

    # Lane-dense padded feature dim (multiple of 128) -> unmasked vector stores.
    F_pad = _round_up(F_out, LANE)

    # Tile the adjacency only when it is large enough to matter.
    if N <= adj_tile:
        TM = TK = N
        N_pad = N
    else:
        TM = TK = adj_tile
        N_pad = _round_up(N, adj_tile)

    # Zero padding: padded adj rows/cols contribute nothing; padded rows sliced off.
    if N_pad != N:
        x = jnp.pad(x, ((0, 0), (0, N_pad - N), (0, 0)))
        adj = jnp.pad(adj, ((0, 0), (0, N_pad - N), (0, N_pad - N)))
    w_p = weight if F_pad == F_out else jnp.pad(weight, ((0, 0), (0, F_pad - F_out)))
    b_p = bias.reshape(1, F_out).astype(jnp.float32)
    if F_pad != F_out:
        b_p = jnp.pad(b_p, ((0, 0), (0, F_pad - F_out)))

    x_c = x.astype(compute_dtype)
    adj_c = adj.astype(compute_dtype)
    w_c = w_p.astype(compute_dtype)

    # ------------------------- pass 1: feature transform ---------------------
    M = B * N_pad
    x2 = x_c.reshape(M, F_in)
    if M > 512 and M % 512 == 0:
        TH = 512
    elif M > 256 and M % 256 == 0:
        TH = 256
    else:
        TH = M

    h = pl.pallas_call(
        _h_kernel,
        out_shape=jax.ShapeDtypeStruct((M, F_pad), compute_dtype),
        grid_spec=pltpu.PrefetchScalarGridSpec(
            num_scalar_prefetch=0,
            grid=(M // TH,),
            in_specs=[
                pl.BlockSpec((TH, F_in), lambda i: (i, 0)),
                pl.BlockSpec((F_in, F_pad), lambda i: (0, 0)),   # W stays resident
                pl.BlockSpec((1, F_pad), lambda i: (0, 0)),      # bias stays resident
            ],
            out_specs=pl.BlockSpec((TH, F_pad), lambda i: (i, 0)),
        ),
        compiler_params=pltpu.CompilerParams(
            dimension_semantics=("parallel",)),
    )(x2, w_c, b_p)
    h = h.reshape(B, N_pad, F_pad)

    # ------------------------- pass 2: aggregation + ReLU ---------------------
    grid = (B, N_pad // TM, N_pad // TK)
    itemsize = jnp.dtype(compute_dtype).itemsize
    vmem_need = (2 * TM * TK * itemsize        # adj double buffer
                 + 2 * TK * F_pad * itemsize   # h double buffer
                 + 2 * TM * F_pad * 4          # out double buffer (f32)
                 + TM * F_pad * 4)             # accumulator scratch
    vmem_limit = int(max(vmem_need + (4 << 20), 32 << 20))

    out = pl.pallas_call(
        _agg_kernel,
        out_shape=jax.ShapeDtypeStruct((B, N_pad, F_pad), jnp.float32),
        grid_spec=pltpu.PrefetchScalarGridSpec(
            num_scalar_prefetch=0,
            grid=grid,
            in_specs=[
                pl.BlockSpec((pl.Squeezed(), TM, TK), lambda b, i, k: (b, i, k)),
                pl.BlockSpec((pl.Squeezed(), TK, F_pad), lambda b, i, k: (b, k, 0)),
            ],
            out_specs=pl.BlockSpec((pl.Squeezed(), TM, F_pad),
                                   lambda b, i, k: (b, i, 0)),
            scratch_shapes=[pltpu.VMEM((TM, F_pad), jnp.float32)],
        ),
        compiler_params=pltpu.CompilerParams(
            dimension_semantics=("parallel", "parallel", "arbitrary"),
            vmem_limit_bytes=vmem_limit),
    )(adj_c, h)

    return out[:, :N, :F_out]


def init_params(key, in_features, out_features, gain=1.414):
    # torch.nn.init.xavier_uniform_: U(-a, a), a = gain * sqrt(6 / (fan_in + fan_out))
    a = gain * math.sqrt(6.0 / (in_features + out_features))
    weight = jax.random.uniform(
        key, (in_features, out_features), minval=-a, maxval=a, dtype=jnp.float32)
    bias = jnp.zeros((1, 1, out_features), dtype=jnp.float32)
    return weight, bias


def reference(x, adj, weight, bias):
    h = jnp.matmul(x, weight) - bias
    return jax.nn.relu(jnp.matmul(adj, h))


if __name__ == "__main__":
    B, N, F_in, F_out = 2, 16, 8, 32

    key = jax.random.PRNGKey(0)
    kx, kadj, kw = jax.random.split(key, 3)

    x = jax.random.normal(kx, (B, N, F_in), dtype=jnp.float32)
    # Symmetric adjacency (values just need to be deterministic).
    adj_raw = jax.random.uniform(kadj, (B, N, N), dtype=jnp.float32)
    adj = (adj_raw + jnp.swapaxes(adj_raw, -1, -2)) * 0.5

    weight, bias = init_params(kw, F_in, F_out)

    out = graph_convolution(x, adj, weight, bias)
    out = jax.block_until_ready(out)

    ref = reference(x, adj, weight, bias)
    assert out.shape == (B, N, F_out)
    assert jnp.allclose(out, ref, atol=1e-4, rtol=1e-4), "mismatch vs reference"

    print("KERNEL_OK")
</pallas_src>

<mosaic_0001>
module attributes {stable_mosaic.version = 11 : i64} {
  func.func @_h_kernel(%arg0: i32, %arg1: memref<32x8xf32, #tpu.memory_space<vmem>>, %arg2: memref<8x128xf32, #tpu.memory_space<vmem>>, %arg3: memref<1x128xf32, #tpu.memory_space<vmem>>, %arg4: memref<32x128xf32, #tpu.memory_space<vmem>>) attributes {dimension_semantics = [#tpu.dimension_semantics<parallel>], iteration_bounds = array<i64: 1>, scalar_prefetch = 0 : i64, scratch_operands = 0 : i64, tpu.core_type = #tpu.core_type<tc>, window_params = [{transform_indices = @transform_0, window_bounds = array<i64: 32, 8>}, {pipeline_mode = #tpu.pipeline_mode<synchronous>, transform_indices = @transform_1, window_bounds = array<i64: 8, 128>}, {pipeline_mode = #tpu.pipeline_mode<synchronous>, transform_indices = @transform_2, window_bounds = array<i64: 1, 128>}, {transform_indices = @transform_3, window_bounds = array<i64: 32, 128>}]} {
    %c0 = arith.constant 0 : index
    %c0_0 = arith.constant 0 : index
    %0 = vector.load %arg1[%c0, %c0_0] : memref<32x8xf32, #tpu.memory_space<vmem>>, vector<32x8xf32>
    %c0_1 = arith.constant 0 : index
    %c0_2 = arith.constant 0 : index
    %1 = vector.load %arg2[%c0_1, %c0_2] : memref<8x128xf32, #tpu.memory_space<vmem>>, vector<8x128xf32>
    %cst = arith.constant dense<0.000000e+00> : vector<32x128xf32>
    %2 = tpu.matmul %0, %1, %cst {dimension_numbers = #tpu.dot_dimension_numbers<[1], [0], [0], [1], [0, 0, 1, 1], [], []>} : vector<32x8xf32>, vector<8x128xf32>, vector<32x128xf32> -> vector<32x128xf32>
    %c0_3 = arith.constant 0 : index
    %c0_4 = arith.constant 0 : index
    %3 = vector.load %arg3[%c0_3, %c0_4] : memref<1x128xf32, #tpu.memory_space<vmem>>, vector<1x128xf32>
    %4 = vector.broadcast %3 : vector<1x128xf32> to vector<32x128xf32>
    %5 = arith.subf %2, %4 : vector<32x128xf32>
    %c0_5 = arith.constant 0 : index
    %c0_6 = arith.constant 0 : index
    %6 = vector.load %arg4[%c0_5, %c0_6] : memref<32x128xf32, #tpu.memory_space<vmem>>, vector<32x128xf32>
    tpu.vector_store %arg4[%c0_5, %c0_6], %5 {strides = array<i32>} : memref<32x128xf32, #tpu.memory_space<vmem>>, vector<32x128xf32>,
    return
  }
  func.func @transform_0(%arg0: i32) -> (i32, i32) {
    %c0_i32 = arith.constant 0 : i32
    %c0_i32_0 = arith.constant 0 : i32
    return %arg0, %c0_i32 : i32, i32
  }
  func.func @transform_1(%arg0: i32) -> (i32, i32) {
    %c0_i32 = arith.constant 0 : i32
    %c0_i32_0 = arith.constant 0 : i32
    %c0_i32_1 = arith.constant 0 : i32
    return %c0_i32, %c0_i32_0 : i32, i32
  }
  func.func @transform_2(%arg0: i32) -> (i32, i32) {
    %c0_i32 = arith.constant 0 : i32
    %c0_i32_0 = arith.constant 0 : i32
    %c0_i32_1 = arith.constant 0 : i32
    return %c0_i32, %c0_i32_0 : i32, i32
  }
  func.func @transform_3(%arg0: i32) -> (i32, i32) {
    %c0_i32 = arith.constant 0 : i32
    %c0_i32_0 = arith.constant 0 : i32
    return %arg0, %c0_i32 : i32, i32
  }
}

</mosaic_0001>

<llo_original>
// kernel: tpu_custom_call.1
$region0: #{tpu_custom_call.1}
  #allocation0 [shape = 'u32[]', space=smem, size = 0x4, offset = 0x4, fixed_abs, tag = 'smem constant byte address 0x4 - core index']
  #allocation1 [shape = 'u32[144,128]{1,0:T(1,128)}', space=vmem, size = 0x12000, scoped, tag = 'internal scratch']
  %s0 = inlined_call_operand.vmem [shape: f32[32,8], index: 0, kind: input, shape index: {}]
  %s1 = inlined_call_operand.vmem [shape: f32[8,128], index: 1, kind: input, shape index: {}]
  %s2 = inlined_call_operand.vmem [shape: f32[1,128], index: 2, kind: input, shape index: {}]
  %s3 = inlined_call_operand.hbm [shape: f32[32,128], index: 3, kind: output, shape index: {}]
  %s4 = sld [smem:[#allocation0]]
  $region22: #{tpu_custom_call.1} parent=0
    _
  %s6 = ssub.s32 1, %s4
  %s7 = scalar_select 0, %s6, %s4
  $region1: #{tpu_custom_call.1} parent=0
    #allocation2 [shape = 'u8[16384]{0}', space=vmem, size = 0x4000, scoped, tag = 'output window, operand 0, single buffered']
    #allocation3 [shape = 's32[1]{0}', space=sflag, size = 0x4, scoped, tag = 'scoped memory for tpu_custom_call.1']
    %8 = vsyncpa [#allocation3], 0
    // Predicated region
    $region2: #{tpu_custom_call.1} parent=1 // pred_check
      _
    $region3: #{tpu_custom_call.1} parent=1 // pred_check_branch
      %10 = sbr.rel (0) target = $region5
    $region4: #{tpu_custom_call.1} parent=1 // pred_region
      _
    $region5: #{tpu_custom_call.1} parent=1 // pred_fallthru
      _
    // Predicated region
    $region6: #{tpu_custom_call.1} parent=1 // pred_check
      _
    $region7: #{tpu_custom_call.1} parent=1 // pred_check_branch
      %12 = sbr.rel (0) target = $region9
    $region8: #{tpu_custom_call.1} parent=1 // pred_region
      _
    $region9: #{tpu_custom_call.1} parent=1 // pred_fallthru
      _
    // Predicated region
    $region10: #{tpu_custom_call.1} parent=1 // pred_check
      _
    $region11: #{tpu_custom_call.1} parent=1 // pred_check_branch
      %14 = sbr.rel (0) target = $region13
    $region12: #{tpu_custom_call.1} parent=1 // pred_region
      _
    $region13: #{tpu_custom_call.1} parent=1 // pred_fallthru
      _
    %v15 = vld [vmem:[%s0] sm:$0xff]
    %v16 = vld [vmem:[%s0 + $0x8] sm:$0xff]
    %v17 = vld [vmem:[%s0 + $0x10] sm:$0xff]
    %v18 = vld [vmem:[%s0 + $0x18] sm:$0xff]
    %v19 = vld [vmem:[%s1] sm:$0xff]
    %vm20 = vcmask 64512
    %v22 = vsel %vm20, %v15, 0
    %v25 = vsel %vm20, %v16, 0
    %v28 = vsel %vm20, %v17, 0
    %v31 = vsel %vm20, %v18, 0
    %33 = vmatprep.subr.mxu0 0.0
    %34 = vmatpush1.msra.mxu0 0.0
    %35 = vmatprep.subr.mxu0 0.0
    %36 = vmatpush1.msra.mxu0 0.0
    %37 = vmatprep.subr.mxu0 0.0
    %38 = vmatpush1.msra.mxu0 0.0
    %39 = vmatprep.subr.mxu0 0.0
    %40 = vmatpush1.msra.mxu0 0.0
    %41 = vmatprep.subr.mxu0 0.0
    %42 = vmatpush1.msra.mxu0 0.0
    %43 = vmatprep.subr.mxu0 0.0
    %44 = vmatpush1.msra.mxu0 0.0
    %45 = vmatprep.subr.mxu0 0.0
    %46 = vmatpush1.msra.mxu0 0.0
    %47 = vmatprep.subr.mxu0 0.0
    %48 = vmatpush1.msra.mxu0 0.0
    %49 = vmatprep.subr.mxu0 0.0
    %50 = vmatpush1.msra.mxu0 0.0
    %51 = vmatprep.subr.mxu0 0.0
    %52 = vmatpush1.msra.mxu0 0.0
    %53 = vmatprep.subr.mxu0 0.0
    %54 = vmatpush1.msra.mxu0 0.0
    %55 = vmatprep.subr.mxu0 0.0
    %56 = vmatpush1.msra.mxu0 0.0
    %57 = vmatprep.subr.mxu0 0.0
    %58 = vmatpush1.msra.mxu0 0.0
    %59 = vmatprep.subr.mxu0 0.0
    %60 = vmatpush1.msra.mxu0 0.0
    %61 = vmatprep.subr.mxu0 0.0
    %62 = vmatpush1.msra.mxu0 0.0
    %63 = vmatprep.subr.mxu0 0.0
    %64 = vmatpush1.msra.mxu0 %v19
    %65 = vmatprep.subr.mxu0 0.0
    %66 = vmatpush2.msra.mxu0 0.0
    %67 = vmatprep.subr.mxu0 0.0
    %68 = vmatpush2.msra.mxu0 0.0
    %69 = vmatprep.subr.mxu0 0.0
    %70 = vmatpush2.msra.mxu0 0.0
    %71 = vmatprep.subr.mxu0 0.0
    %72 = vmatpush2.msra.mxu0 0.0
    %73 = vmatprep.subr.mxu0 0.0
    %74 = vmatpush2.msra.mxu0 0.0
    %75 = vmatprep.subr.mxu0 0.0
    %76 = vmatpush2.msra.mxu0 0.0
    %77 = vmatprep.subr.mxu0 0.0
    %78 = vmatpush2.msra.mxu0 0.0
    %79 = vmatprep.subr.mxu0 0.0
    %80 = vmatpush2.msra.mxu0 0.0
    %81 = vmatprep.subr.mxu0 0.0
    %82 = vmatpush2.msra.mxu0 0.0
    %83 = vmatprep.subr.mxu0 0.0
    %84 = vmatpush2.msra.mxu0 0.0
    %85 = vmatprep.subr.mxu0 0.0
    %86 = vmatpush2.msra.mxu0 0.0
    %87 = vmatprep.subr.mxu0 0.0
    %88 = vmatpush2.msra.mxu0 0.0
    %89 = vmatprep.subr.mxu0 0.0
    %90 = vmatpush2.msra.mxu0 0.0
    %91 = vmatprep.subr.mxu0 0.0
    %92 = vmatpush2.msra.mxu0 0.0
    %93 = vmatprep.subr.mxu0 0.0
    %94 = vmatpush2.msra.mxu0 0.0
    %95 = vmatprep.subr.mxu0 0.0
    %96 = vmatpush2.msra.mxu0 0.0
    %97 = vmatprep.mubr.f32.mxu0 0.0
    %98 = vmatmul.mubr.f32.gmra.mxu0 %v22
    %v99 = vpop.f32.mrf.mxu0
    %v100 = vadd.f32 0.0, %v99
    %v101 = vpop.f32.mrf.mxu0
    %102 = vmatprep.mubr.f32.mxu0 0.0
    %103 = vmatmul.mubr.f32.gmra.mxu0 %v25
    %v104 = vpop.f32.mrf.mxu0
    %v105 = vadd.f32 0.0, %v104
    %v106 = vpop.f32.mrf.mxu0
    %107 = vmatprep.mubr.f32.mxu0 0.0
    %108 = vmatmul.mubr.f32.gmra.mxu0 %v28
    %v109 = vpop.f32.mrf.mxu0
    %v110 = vadd.f32 0.0, %v109
    %v111 = vpop.f32.mrf.mxu0
    %112 = vmatprep.mubr.f32.mxu0 0.0
    %113 = vmatmul.mubr.f32.gmra.mxu0 %v31
    %v114 = vpop.f32.mrf.mxu0
    %v115 = vadd.f32 0.0, %v114
    %v116 = vpop.f32.mrf.mxu0
    %117 = vdwg.mxu0
    %v118 = vld [vmem:[%s2] sm:$0x1]
    %v120 = vlaneseq
    %v121 = vshrl.u32 %v120, 7
    %v122 = vsub.s32 0, %v121
    %v123 = vrot.slane %v118, %v122
    %v125 = vsub.f32 %v100, %v123
    %v126 = vsub.f32 %v105, %v123
    %v127 = vsub.f32 %v110, %v123
    %v128 = vsub.f32 %v115, %v123
    %129 = vst [vmem:[#allocation2] sm:$0xff] %v125
    %130 = vst [vmem:[#allocation2 + $0x8] sm:$0xff] %v126
    %131 = vst [vmem:[#allocation2 + $0x10] sm:$0xff] %v127
    %132 = vst [vmem:[#allocation2 + $0x18] sm:$0xff] %v128
    // Predicated region
    $region14: #{tpu_custom_call.1} parent=1 // pred_check
      _
    $region15: #{tpu_custom_call.1} parent=1 // pred_check_branch
      %134 = sbr.rel (0) target = $region17
    $region16: #{tpu_custom_call.1} parent=1 // pred_region
      %s136 = ssub.s32 512, 512
      %137 = vsyncadd [#allocation3], %s136
      %s138 = sshll.u32 [#allocation2], 4
      %s139 = int_to_ptr.vmem [resolvable:$true] %s138
      %144 = dma.vmem_to_hbm [thread:$0]  %s139, 512, %s3, [#allocation3], 128, 128, 8
    $region17: #{tpu_custom_call.1} parent=1 // pred_fallthru
      _
    // Predicated region
    $region18: #{tpu_custom_call.1} parent=1 // pred_check
      _
    $region19: #{tpu_custom_call.1} parent=1 // pred_check_branch
      %146 = sbr.rel (0) target = $region21
    $region20: #{tpu_custom_call.1} parent=1 // pred_region
      %147 = dma.done [#allocation3], 512
    $region21: #{tpu_custom_call.1} parent=1 // pred_fallthru
      _
    %148 = vsyncpa [#allocation3], 1

</llo_original>
